<compile_context>
chip_gen: v5e
topology: v5e:2x2
jax: 0.10.0
libtpu: 0.0.40
codegen_flags: <defaults>
</compile_context>

<pallas_src>
import jax
import jax.numpy as jnp
from jax.experimental import pallas as pl
from jax.experimental.pallas import tpu as pltpu

SUBLANE = 8  # sublane granularity for the batch (second-to-last) dim


def _round_up(n, m):
    return ((n + m - 1) // m) * m


def qnet_kernel(x_ref, w1_ref, b1_ref, w2_ref, b2_ref, w3_ref, b3_ref, o_ref):
    # x_ref: one (tb, state_size) f32 batch tile. Weights (bf16) / biases (f32) are
    # whole-array VMEM residents shared across all grid steps. MXU: bf16 x bf16 -> f32;
    # VPU epilogue (bias + ReLU) stays in f32.
    x = x_ref[...].astype(jnp.bfloat16)                                  # (tb, S) bf16

    h1 = jnp.dot(x, w1_ref[...], preferred_element_type=jnp.float32)
    h1 = jnp.maximum(h1 + b1_ref[...], 0.0)                              # (tb, H1) f32

    h2 = jnp.dot(h1.astype(jnp.bfloat16), w2_ref[...],
                 preferred_element_type=jnp.float32)
    h2 = jnp.maximum(h2 + b2_ref[...], 0.0)                              # (tb, H2) f32

    out = jnp.dot(h2.astype(jnp.bfloat16), w3_ref[...],
                  preferred_element_type=jnp.float32) + b3_ref[...]
    o_ref[...] = out.astype(o_ref.dtype)                                 # (tb, A) f32


def qnetwork_forward(x, params, block_rows=2048):
    """x: (batch, state_size) f32. params: f32 (in,out) weights and (1,out) biases."""
    w1, b1, w2, b2, w3, b3 = params
    batch, state_size = x.shape
    hidden1 = w1.shape[1]
    hidden2 = w2.shape[1]
    action_size = w3.shape[1]

    # Batch tile: multiple of 8 sublanes, capped by block_rows, and when the batch is
    # large enough keep >=2 grid steps so the "parallel" axis can feed both TCs on v7x.
    half = _round_up(pl.cdiv(batch, 2), SUBLANE)
    tb = max(SUBLANE, min(_round_up(block_rows, SUBLANE), half))
    b_pad = _round_up(batch, tb)
    grid = (b_pad // tb,)

    # Only pad ragged batch rows (cheap, zeros) — feature dims stay at natural width.
    x_in = x if b_pad == batch else jnp.pad(x, ((0, b_pad - batch), (0, 0)))

    # Weights in bf16 (MXU operands), biases in f32 (epilogue); all tiny, VMEM-resident.
    bf = jnp.bfloat16
    w1_c, w2_c, w3_c = w1.astype(bf), w2.astype(bf), w3.astype(bf)
    b1_c, b2_c, b3_c = b1.astype(jnp.float32), b2.astype(jnp.float32), b3.astype(jnp.float32)

    resident = pl.BlockSpec(memory_space=pltpu.MemorySpace.VMEM)

    flops = 2 * b_pad * (state_size * hidden1 + hidden1 * hidden2 + hidden2 * action_size)
    bytes_accessed = (x_in.size * 4 + b_pad * action_size * 4
                      + (w1_c.size + w2_c.size + w3_c.size) * 2
                      + (b1_c.size + b2_c.size + b3_c.size) * 4)

    out_p = pl.pallas_call(
        qnet_kernel,
        out_shape=jax.ShapeDtypeStruct((b_pad, action_size), jnp.float32),
        grid=grid,
        in_specs=[
            pl.BlockSpec((tb, state_size), lambda i: (i, 0)),  # x: tiled over batch
            resident, resident,                                # w1, b1
            resident, resident,                                # w2, b2
            resident, resident,                                # w3, b3
        ],
        out_specs=pl.BlockSpec((tb, action_size), lambda i: (i, 0)),
        compiler_params=pltpu.CompilerParams(
            dimension_semantics=("parallel",),  # shards batch tiles over 2 TCs on v7x
        ),
        cost_estimate=pl.CostEstimate(
            flops=flops, transcendentals=0, bytes_accessed=bytes_accessed),
    )(x_in, w1_c, b1_c, w2_c, b2_c, w3_c, b3_c)

    # Drop the ragged-batch padding rows (feature dim is already the real width).
    return out_p[:batch]


def init_params(key, state_size, action_size, hidden_size=64):
    # Deterministic synthetic init (mimics nn.Linear uniform fan-in init).
    # Weights stored as (in_features, out_features): kernel computes x @ W + b.
    def linear_init(k, fan_in, fan_out):
        k_w, k_b = jax.random.split(k)
        bound = 1.0 / jnp.sqrt(fan_in)
        w = jax.random.uniform(k_w, (fan_in, fan_out), jnp.float32, -bound, bound)
        b = jax.random.uniform(k_b, (1, fan_out), jnp.float32, -bound, bound)
        return w, b

    k1, k2, k3 = jax.random.split(key, 3)
    w1, b1 = linear_init(k1, state_size, hidden_size)
    w2, b2 = linear_init(k2, hidden_size, hidden_size)
    w3, b3 = linear_init(k3, hidden_size, action_size)
    return (w1, b1, w2, b2, w3, b3)


def ref_forward(x, params):
    # Pure-JAX reference using the same bf16-rounded matmul operands / f32 accumulate.
    w1, b1, w2, b2, w3, b3 = params
    bf = lambda a: a.astype(jnp.bfloat16).astype(jnp.float32)
    h = jnp.maximum(bf(x) @ bf(w1) + b1, 0.0)
    h = jnp.maximum(bf(h) @ bf(w2) + b2, 0.0)
    return bf(h) @ bf(w3) + b3


# TODO(synk): save_model (torch.save checkpoint I/O) is host-side and has no Pallas equivalent.

if __name__ == "__main__":
    key = jax.random.PRNGKey(0)
    k_params, k_x = jax.random.split(key)

    # Small shapes consistent with the module; batch=200 exercises a ragged batch
    # (pads to 208 rows) and a 2-step grid (two 104-row tiles -> both TCs on v7x).
    batch, state_size, action_size, hidden_size = 200, 8, 4, 64

    params = init_params(k_params, state_size, action_size, hidden_size)
    x = jax.random.normal(k_x, (batch, state_size), jnp.float32)

    out = qnetwork_forward(x, params)
    out = jax.block_until_ready(out)

    ref = ref_forward(x, params)
    assert out.shape == (batch, action_size)
    assert jnp.allclose(out, ref, atol=2e-2, rtol=2e-2), "mismatch vs reference"

    print("KERNEL_OK")
</pallas_src>

<mosaic_0001>
module attributes {stable_mosaic.version = 11 : i64} {
  func.func @qnet_kernel(%arg0: i32, %arg1: memref<104x8xf32, #tpu.memory_space<vmem>>, %arg2: memref<8x64xbf16, #tpu.memory_space<vmem>>, %arg3: memref<1x64xf32, #tpu.memory_space<vmem>>, %arg4: memref<64x64xbf16, #tpu.memory_space<vmem>>, %arg5: memref<1x64xf32, #tpu.memory_space<vmem>>, %arg6: memref<64x4xbf16, #tpu.memory_space<vmem>>, %arg7: memref<1x4xf32, #tpu.memory_space<vmem>>, %arg8: memref<104x4xf32, #tpu.memory_space<vmem>>) attributes {dimension_semantics = [#tpu.dimension_semantics<parallel>], iteration_bounds = array<i64: 2>, scalar_prefetch = 0 : i64, scratch_operands = 0 : i64, tpu.core_type = #tpu.core_type<tc>, window_params = [{transform_indices = @transform_0, window_bounds = array<i64: 104, 8>}, {pipeline_mode = #tpu.pipeline_mode<synchronous>, transform_indices = @transform_1, window_bounds = array<i64: 8, 64>}, {pipeline_mode = #tpu.pipeline_mode<synchronous>, transform_indices = @transform_2, window_bounds = array<i64: 1, 64>}, {pipeline_mode = #tpu.pipeline_mode<synchronous>, transform_indices = @transform_3, window_bounds = array<i64: 64, 64>}, {pipeline_mode = #tpu.pipeline_mode<synchronous>, transform_indices = @transform_4, window_bounds = array<i64: 1, 64>}, {pipeline_mode = #tpu.pipeline_mode<synchronous>, transform_indices = @transform_5, window_bounds = array<i64: 64, 4>}, {pipeline_mode = #tpu.pipeline_mode<synchronous>, transform_indices = @transform_6, window_bounds = array<i64: 1, 4>}, {transform_indices = @transform_7, window_bounds = array<i64: 104, 4>}]} {
    %c0 = arith.constant 0 : index
    %c0_0 = arith.constant 0 : index
    %0 = vector.load %arg1[%c0, %c0_0] : memref<104x8xf32, #tpu.memory_space<vmem>>, vector<104x8xf32>
    %1 = arith.truncf %0 : vector<104x8xf32> to vector<104x8xbf16>
    %c0_1 = arith.constant 0 : index
    %c0_2 = arith.constant 0 : index
    %2 = vector.load %arg2[%c0_1, %c0_2] : memref<8x64xbf16, #tpu.memory_space<vmem>>, vector<8x64xbf16>
    %cst = arith.constant dense<0.000000e+00> : vector<104x64xf32>
    %3 = tpu.matmul %1, %2, %cst {dimension_numbers = #tpu.dot_dimension_numbers<[1], [0], [0], [1], [0, 0, 1, 1], [], []>} : vector<104x8xbf16>, vector<8x64xbf16>, vector<104x64xf32> -> vector<104x64xf32>
    %c0_3 = arith.constant 0 : index
    %c0_4 = arith.constant 0 : index
    %4 = vector.load %arg3[%c0_3, %c0_4] : memref<1x64xf32, #tpu.memory_space<vmem>>, vector<1x64xf32>
    %5 = vector.broadcast %4 : vector<1x64xf32> to vector<104x64xf32>
    %6 = arith.addf %3, %5 : vector<104x64xf32>
    %cst_5 = arith.constant 0.000000e+00 : f32
    %7 = vector.broadcast %cst_5 : f32 to vector<104x64xf32>
    %8 = arith.maximumf %6, %7 : vector<104x64xf32>
    %9 = arith.truncf %8 : vector<104x64xf32> to vector<104x64xbf16>
    %c0_6 = arith.constant 0 : index
    %c0_7 = arith.constant 0 : index
    %10 = vector.load %arg4[%c0_6, %c0_7] : memref<64x64xbf16, #tpu.memory_space<vmem>>, vector<64x64xbf16>
    %cst_8 = arith.constant dense<0.000000e+00> : vector<104x64xf32>
    %11 = tpu.matmul %9, %10, %cst_8 {dimension_numbers = #tpu.dot_dimension_numbers<[1], [0], [0], [1], [0, 0, 1, 1], [], []>} : vector<104x64xbf16>, vector<64x64xbf16>, vector<104x64xf32> -> vector<104x64xf32>
    %c0_9 = arith.constant 0 : index
    %c0_10 = arith.constant 0 : index
    %12 = vector.load %arg5[%c0_9, %c0_10] : memref<1x64xf32, #tpu.memory_space<vmem>>, vector<1x64xf32>
    %13 = vector.broadcast %12 : vector<1x64xf32> to vector<104x64xf32>
    %14 = arith.addf %11, %13 : vector<104x64xf32>
    %cst_11 = arith.constant 0.000000e+00 : f32
    %15 = vector.broadcast %cst_11 : f32 to vector<104x64xf32>
    %16 = arith.maximumf %14, %15 : vector<104x64xf32>
    %17 = arith.truncf %16 : vector<104x64xf32> to vector<104x64xbf16>
    %c0_12 = arith.constant 0 : index
    %c0_13 = arith.constant 0 : index
    %18 = vector.load %arg6[%c0_12, %c0_13] : memref<64x4xbf16, #tpu.memory_space<vmem>>, vector<64x4xbf16>
    %cst_14 = arith.constant dense<0.000000e+00> : vector<104x4xf32>
    %19 = tpu.matmul %17, %18, %cst_14 {dimension_numbers = #tpu.dot_dimension_numbers<[1], [0], [0], [1], [0, 0, 1, 1], [], []>} : vector<104x64xbf16>, vector<64x4xbf16>, vector<104x4xf32> -> vector<104x4xf32>
    %c0_15 = arith.constant 0 : index
    %c0_16 = arith.constant 0 : index
    %20 = vector.load %arg7[%c0_15, %c0_16] : memref<1x4xf32, #tpu.memory_space<vmem>>, vector<1x4xf32>
    %21 = vector.broadcast %20 : vector<1x4xf32> to vector<104x4xf32>
    %22 = arith.addf %19, %21 : vector<104x4xf32>
    %c0_17 = arith.constant 0 : index
    %c0_18 = arith.constant 0 : index
    %23 = vector.load %arg8[%c0_17, %c0_18] : memref<104x4xf32, #tpu.memory_space<vmem>>, vector<104x4xf32>
    tpu.vector_store %arg8[%c0_17, %c0_18], %22 {strides = array<i32>} : memref<104x4xf32, #tpu.memory_space<vmem>>, vector<104x4xf32>,
    return
  }
  func.func @transform_0(%arg0: i32) -> (i32, i32) {
    %c0_i32 = arith.constant 0 : i32
    %c0_i32_0 = arith.constant 0 : i32
    return %arg0, %c0_i32 : i32, i32
  }
  func.func @transform_1(%arg0: i32) -> (i32, i32) {
    %c0_i32 = arith.constant 0 : i32
    %c0_i32_0 = arith.constant 0 : i32
    %c0_i32_1 = arith.constant 0 : i32
    return %c0_i32, %c0_i32_0 : i32, i32
  }
  func.func @transform_2(%arg0: i32) -> (i32, i32) {
    %c0_i32 = arith.constant 0 : i32
    %c0_i32_0 = arith.constant 0 : i32
    %c0_i32_1 = arith.constant 0 : i32
    return %c0_i32, %c0_i32_0 : i32, i32
  }
  func.func @transform_3(%arg0: i32) -> (i32, i32) {
    %c0_i32 = arith.constant 0 : i32
    %c0_i32_0 = arith.constant 0 : i32
    %c0_i32_1 = arith.constant 0 : i32
    return %c0_i32, %c0_i32_0 : i32, i32
  }
  func.func @transform_4(%arg0: i32) -> (i32, i32) {
    %c0_i32 = arith.constant 0 : i32
    %c0_i32_0 = arith.constant 0 : i32
    %c0_i32_1 = arith.constant 0 : i32
    return %c0_i32, %c0_i32_0 : i32, i32
  }
  func.func @transform_5(%arg0: i32) -> (i32, i32) {
    %c0_i32 = arith.constant 0 : i32
    %c0_i32_0 = arith.constant 0 : i32
    %c0_i32_1 = arith.constant 0 : i32
    return %c0_i32, %c0_i32_0 : i32, i32
  }
  func.func @transform_6(%arg0: i32) -> (i32, i32) {
    %c0_i32 = arith.constant 0 : i32
    %c0_i32_0 = arith.constant 0 : i32
    %c0_i32_1 = arith.constant 0 : i32
    return %c0_i32, %c0_i32_0 : i32, i32
  }
  func.func @transform_7(%arg0: i32) -> (i32, i32) {
    %c0_i32 = arith.constant 0 : i32
    %c0_i32_0 = arith.constant 0 : i32
    return %arg0, %c0_i32 : i32, i32
  }
}

</mosaic_0001>

<llo_original>
// kernel: tpu_custom_call.1
$region0: #{tpu_custom_call.1}
  #allocation0 [shape = 'u32[]', space=smem, size = 0x4, offset = 0x4, fixed_abs, tag = 'smem constant byte address 0x4 - core index']
  #allocation1 [shape = 'u32[72,128]{1,0:T(1,128)}', space=vmem, size = 0x9000, scoped, tag = 'internal scratch']
  %s0 = inlined_call_operand.vmem [shape: f32[208,8], index: 0, kind: input, shape index: {}]
  %s1 = inlined_call_operand.vmem [shape: bf16[8,64], index: 1, kind: input, shape index: {}]
  %s2 = inlined_call_operand.vmem [shape: f32[1,64], index: 2, kind: input, shape index: {}]
  %s3 = inlined_call_operand.vmem [shape: bf16[64,64], index: 3, kind: input, shape index: {}]
  %s4 = inlined_call_operand.vmem [shape: f32[1,64], index: 4, kind: input, shape index: {}]
  %s5 = inlined_call_operand.vmem [shape: bf16[64,4], index: 5, kind: input, shape index: {}]
  %s6 = inlined_call_operand.vmem [shape: f32[1,4], index: 6, kind: input, shape index: {}]
  %s7 = inlined_call_operand.vmem [shape: f32[208,4], index: 7, kind: output, shape index: {}]
  %s8 = sld [smem:[#allocation0]]
  $region61: #{tpu_custom_call.1} parent=0
    _
  %s10 = ssub.s32 1, %s8
  %s11 = scalar_select 0, %s10, %s8
  loop: start=0, step=1, limit=4
  $region2: #{tpu_custom_call.1} parent=0 // loop_pre_header
    _
  $region3: #{tpu_custom_call.1} parent=0 // loop_header
    %s13 = sphi 0, %s17
    %p14 = scmp.ge.s32.totalorder %s13, 4
    %s23 = sphi 0, %s25
    %s26 = sphi 0, %s23
    %s27 = sphi 0, %s26
    %s43 = sphi 0, %s27
    %s47 = sphi 0, %s47
    %s49 = sphi 0, %s47
    %s50 = sphi 0, %s49
    %s64 = sphi 0, %s50
    %s68 = sphi 0, %s68
    %s70 = sphi 0, %s68
    %s71 = sphi 0, %s70
    %s85 = sphi 0, %s71
    %s89 = sphi 0, %s89
    %s91 = sphi 0, %s89
    %s92 = sphi 0, %s91
    %s106 = sphi 0, %s92
    %s110 = sphi 0, %s110
    %s112 = sphi 0, %s110
    %s113 = sphi 0, %s112
    %s127 = sphi 0, %s113
    %s131 = sphi 0, %s131
    %s133 = sphi 0, %s131
    %s134 = sphi 0, %s133
    %s148 = sphi 0, %s134
    %s152 = sphi 0, %s152
    %s154 = sphi 0, %s152
    %s155 = sphi 0, %s154
    %s169 = sphi 0, %s155
    %s175 = sphi 0, %s177
    %s178 = sphi 0, %s175
    %s179 = sphi 0, %s178
    %s195 = sphi 0, %s179
  $region4: #{tpu_custom_call.1} parent=0 // loop_header_branch
    %16 = sbr.rel (%p14) target = $region8
  $region5: #{tpu_custom_call.1} parent=0 // loop_body
    %s18 = ssub.s32 %s13, 1
    %s19 = ssub.s32 %s13, 2
    %s20 = sadd.s32 %s13, 1
    %s21 = ssub.s32 %s13, %s20
    %p22 = scmp.eq.s32.totalorder %s21, 0
    %s24 = sadd.s32 %s23, 1
    %s25 = scalar_select %p22, %s23, %s24
    %p28 = pneg %p22
    %p29 = scmp.eq.s32.totalorder %s13, 1
    %p30 = por %p28, %p29
    %p31 = scmp.ne.s32.totalorder %s23, %s26
    %p32 = scmp.eq.s32.totalorder %s13, 0
    %p33 = por %p31, %p32
    %p34 = scmp.ne.s32.totalorder %s23, %s26
    %p35 = scmp.eq.s32.totalorder %s18, 1
    %p36 = por %p34, %p35
    %p37 = scmp.ne.s32.totalorder %s26, %s27
    %p38 = scmp.eq.s32.totalorder %s18, 0
    %p39 = por %p37, %p38
    %p40 = scmp.ne.s32.totalorder %s26, %s27
    %p41 = scmp.eq.s32.totalorder %s19, 1
    %p42 = por %p40, %p41
    %p44 = scmp.ne.s32.totalorder %s27, %s43
    %p45 = scmp.eq.s32.totalorder %s19, 0
    %p46 = por %p44, %p45
    %s48 = sadd.s32 %s47, 1
    %p51 = scmp.eq.s32.totalorder %s13, 1
    %p52 = scmp.ne.s32.totalorder %s47, %s49
    %p53 = scmp.eq.s32.totalorder %s13, 0
    %p54 = por %p52, %p53
    %p55 = scmp.ne.s32.totalorder %s47, %s49
    %p56 = scmp.eq.s32.totalorder %s18, 1
    %p57 = por %p55, %p56
    %p58 = scmp.ne.s32.totalorder %s49, %s50
    %p59 = scmp.eq.s32.totalorder %s18, 0
    %p60 = por %p58, %p59
    %p61 = scmp.ne.s32.totalorder %s49, %s50
    %p62 = scmp.eq.s32.totalorder %s19, 1
    %p63 = por %p61, %p62
    %p65 = scmp.ne.s32.totalorder %s50, %s64
    %p66 = scmp.eq.s32.totalorder %s19, 0
    %p67 = por %p65, %p66
    %s69 = sadd.s32 %s68, 1
    %p72 = scmp.eq.s32.totalorder %s13, 1
    %p73 = scmp.ne.s32.totalorder %s68, %s70
    %p74 = scmp.eq.s32.totalorder %s13, 0
    %p75 = por %p73, %p74
    %p76 = scmp.ne.s32.totalorder %s68, %s70
    %p77 = scmp.eq.s32.totalorder %s18, 1
    %p78 = por %p76, %p77
    %p79 = scmp.ne.s32.totalorder %s70, %s71
    %p80 = scmp.eq.s32.totalorder %s18, 0
    %p81 = por %p79, %p80
    %p82 = scmp.ne.s32.totalorder %s70, %s71
    %p83 = scmp.eq.s32.totalorder %s19, 1
    %p84 = por %p82, %p83
    %p86 = scmp.ne.s32.totalorder %s71, %s85
    %p87 = scmp.eq.s32.totalorder %s19, 0
    %p88 = por %p86, %p87
    %s90 = sadd.s32 %s89, 1
    %p93 = scmp.eq.s32.totalorder %s13, 1
    %p94 = scmp.ne.s32.totalorder %s89, %s91
    %p95 = scmp.eq.s32.totalorder %s13, 0
    %p96 = por %p94, %p95
    %p97 = scmp.ne.s32.totalorder %s89, %s91
    %p98 = scmp.eq.s32.totalorder %s18, 1
    %p99 = por %p97, %p98
    %p100 = scmp.ne.s32.totalorder %s91, %s92
    %p101 = scmp.eq.s32.totalorder %s18, 0
    %p102 = por %p100, %p101
    %p103 = scmp.ne.s32.totalorder %s91, %s92
    %p104 = scmp.eq.s32.totalorder %s19, 1
    %p105 = por %p103, %p104
    %p107 = scmp.ne.s32.totalorder %s92, %s106
    %p108 = scmp.eq.s32.totalorder %s19, 0
    %p109 = por %p107, %p108
    %s111 = sadd.s32 %s110, 1
    %p114 = scmp.eq.s32.totalorder %s13, 1
    %p115 = scmp.ne.s32.totalorder %s110, %s112
    %p116 = scmp.eq.s32.totalorder %s13, 0
    %p117 = por %p115, %p116
    %p118 = scmp.ne.s32.totalorder %s110, %s112
    %p119 = scmp.eq.s32.totalorder %s18, 1
    %p120 = por %p118, %p119
    %p121 = scmp.ne.s32.totalorder %s112, %s113
    %p122 = scmp.eq.s32.totalorder %s18, 0
    %p123 = por %p121, %p122
    %p124 = scmp.ne.s32.totalorder %s112, %s113
    %p125 = scmp.eq.s32.totalorder %s19, 1
    %p126 = por %p124, %p125
    %p128 = scmp.ne.s32.totalorder %s113, %s127
    %p129 = scmp.eq.s32.totalorder %s19, 0
    %p130 = por %p128, %p129
    %s132 = sadd.s32 %s131, 1
    %p135 = scmp.eq.s32.totalorder %s13, 1
    %p136 = scmp.ne.s32.totalorder %s131, %s133
    %p137 = scmp.eq.s32.totalorder %s13, 0
    %p138 = por %p136, %p137
    %p139 = scmp.ne.s32.totalorder %s131, %s133
    %p140 = scmp.eq.s32.totalorder %s18, 1
    %p141 = por %p139, %p140
    %p142 = scmp.ne.s32.totalorder %s133, %s134
    %p143 = scmp.eq.s32.totalorder %s18, 0
    %p144 = por %p142, %p143
    %p145 = scmp.ne.s32.totalorder %s133, %s134
    %p146 = scmp.eq.s32.totalorder %s19, 1
    %p147 = por %p145, %p146
    %p149 = scmp.ne.s32.totalorder %s134, %s148
    %p150 = scmp.eq.s32.totalorder %s19, 0
    %p151 = por %p149, %p150
    %s153 = sadd.s32 %s152, 1
    %p156 = scmp.eq.s32.totalorder %s13, 1
    %p157 = scmp.ne.s32.totalorder %s152, %s154
    %p158 = scmp.eq.s32.totalorder %s13, 0
    %p159 = por %p157, %p158
    %p160 = scmp.ne.s32.totalorder %s152, %s154
    %p161 = scmp.eq.s32.totalorder %s18, 1
    %p162 = por %p160, %p161
    %p163 = scmp.ne.s32.totalorder %s154, %s155
    %p164 = scmp.eq.s32.totalorder %s18, 0
    %p165 = por %p163, %p164
    %p166 = scmp.ne.s32.totalorder %s154, %s155
    %p167 = scmp.eq.s32.totalorder %s19, 1
    %p168 = por %p166, %p167
    %p170 = scmp.ne.s32.totalorder %s155, %s169
    %p171 = scmp.eq.s32.totalorder %s19, 0
    %p172 = por %p170, %p171
    %s173 = ssub.s32 %s13, %s20
    %p174 = scmp.eq.s32.totalorder %s173, 0
    %s176 = sadd.s32 %s175, 1
    %s177 = scalar_select %p174, %s175, %s176
    %p180 = pneg %p174
    %p181 = scmp.eq.s32.totalorder %s13, 1
    %p182 = por %p180, %p181
    %p183 = scmp.ne.s32.totalorder %s175, %s178
    %p184 = scmp.eq.s32.totalorder %s13, 0
    %p185 = por %p183, %p184
    %p186 = scmp.ne.s32.totalorder %s175, %s178
    %p187 = scmp.eq.s32.totalorder %s18, 1
    %p188 = por %p186, %p187
    %p189 = scmp.ne.s32.totalorder %s178, %s179
    %p190 = scmp.eq.s32.totalorder %s18, 0
    %p191 = por %p189, %p190
    %p192 = scmp.ne.s32.totalorder %s178, %s179
    %p193 = scmp.eq.s32.totalorder %s19, 1
    %p194 = por %p192, %p193
    %p196 = scmp.ne.s32.totalorder %s179, %s195
    %p197 = scmp.eq.s32.totalorder %s19, 0
    %p198 = por %p196, %p197
    %p199 = scmp.le.s32.totalorder 1, %s13
    %p200 = scmp.lt.s32.totalorder %s13, 3
    %p201 = pnand %p199, %p200
    %p202 = pneg %p201
    // Predicated region
    $region9: #{tpu_custom_call.1} parent=5 // pred_check
      _
    $region10: #{tpu_custom_call.1} parent=5 // pred_check_branch
      %204 = sbr.rel (%p201) target = $region12
    $region11: #{tpu_custom_call.1} parent=5 // pred_region
      %s205 = ssub.s32 %s13, 1
      // Predicated region
      $region13: #{tpu_custom_call.1} parent=11 // pred_check
        %p206 = pneg %p60
      $region14: #{tpu_custom_call.1} parent=11 // pred_check_branch
        %208 = sbr.rel (%p206) target = $region16
      $region15: #{tpu_custom_call.1} parent=11 // pred_region
        _
      $region16: #{tpu_custom_call.1} parent=11 // pred_fallthru
        _
      // Predicated region
      $region17: #{tpu_custom_call.1} parent=11 // pred_check
        %p209 = pneg %p81
      $region18: #{tpu_custom_call.1} parent=11 // pred_check_branch
        %211 = sbr.rel (%p209) target = $region20
      $region19: #{tpu_custom_call.1} parent=11 // pred_region
        _
      $region20: #{tpu_custom_call.1} parent=11 // pred_fallthru
        _
      // Predicated region
      $region21: #{tpu_custom_call.1} parent=11 // pred_check
        %p212 = pneg %p102
      $region22: #{tpu_custom_call.1} parent=11 // pred_check_branch
        %214 = sbr.rel (%p212) target = $region24
      $region23: #{tpu_custom_call.1} parent=11 // pred_region
        _
      $region24: #{tpu_custom_call.1} parent=11 // pred_fallthru
        _
      // Predicated region
      $region25: #{tpu_custom_call.1} parent=11 // pred_check
        %p215 = pneg %p123
      $region26: #{tpu_custom_call.1} parent=11 // pred_check_branch
        %217 = sbr.rel (%p215) target = $region28
      $region27: #{tpu_custom_call.1} parent=11 // pred_region
        _
      $region28: #{tpu_custom_call.1} parent=11 // pred_fallthru
        _
      // Predicated region
      $region29: #{tpu_custom_call.1} parent=11 // pred_check
        %p218 = pneg %p144
      $region30: #{tpu_custom_call.1} parent=11 // pred_check_branch
        %220 = sbr.rel (%p218) target = $region32
      $region31: #{tpu_custom_call.1} parent=11 // pred_region
        _
      $region32: #{tpu_custom_call.1} parent=11 // pred_fallthru
        _
      // Predicated region
      $region33: #{tpu_custom_call.1} parent=11 // pred_check
        %p221 = pneg %p165
      $region34: #{tpu_custom_call.1} parent=11 // pred_check_branch
        %223 = sbr.rel (%p221) target = $region36
      $region35: #{tpu_custom_call.1} parent=11 // pred_region
        _
      $region36: #{tpu_custom_call.1} parent=11 // pred_fallthru
        _
    $region12: #{tpu_custom_call.1} parent=5 // pred_fallthru
      _
    %p224 = scmp.lt.s32.totalorder %s13, 2
    // Predicated region
    $region37: #{tpu_custom_call.1} parent=5 // pred_check
      %p225 = pneg %p224
    $region38: #{tpu_custom_call.1} parent=5 // pred_check_branch
      %227 = sbr.rel (%p225) target = $region40
    $region39: #{tpu_custom_call.1} parent=5 // pred_region
      // Predicated region
      $region41: #{tpu_custom_call.1} parent=39 // pred_check
        %p228 = pneg %p33
      $region42: #{tpu_custom_call.1} parent=39 // pred_check_branch
        %230 = sbr.rel (%p228) target = $region44
      $region43: #{tpu_custom_call.1} parent=39 // pred_region
        %s231 = smul.u32 13, %s13
        %p232 = scmp.lt.s32.totalorder %s231, 25
        %s233 = scalar_select %p232, %s231, 25
        %s234 = smul.addr %s233, 8
        %s235 = scalar_lea.vmem %s0, %s234
        %s236 = smul.u32 13, %s13
      $region44: #{tpu_custom_call.1} parent=39 // pred_fallthru
        _
    $region40: #{tpu_custom_call.1} parent=5 // pred_fallthru
      _
    %p237 = scmp.le.s32.totalorder 1, %s13
    %p238 = scmp.lt.s32.totalorder %s13, 3
    %p239 = pnand %p237, %p238
    %p240 = pneg %p239
    // Predicated region
    $region45: #{tpu_custom_call.1} parent=5 // pred_check
      _
    $region46: #{tpu_custom_call.1} parent=5 // pred_check_branch
      %242 = sbr.rel (%p239) target = $region48
    $region47: #{tpu_custom_call.1} parent=5 // pred_region
      %s243 = ssub.s32 %s13, 1
      %s244 = smul.u32 13, %s18
      %p245 = scmp.lt.s32.totalorder %s244, 25
      %s246 = scalar_select %p245, %s244, 25
      %s247 = smul.addr %s246, 8
      %s248 = scalar_lea.vmem %s0, %s247
      %p249 = pneg %p39
      %p250 = pneg %p36
      %p251 = pneg %p60
      %p252 = pneg %p57
      %p253 = pneg %p81
      %p254 = pneg %p78
      %p255 = pneg %p102
      %p256 = pneg %p99
      %p257 = pneg %p123
      %p258 = pneg %p120
      %p259 = pneg %p144
      %p260 = pneg %p141
      %p261 = pneg %p165
      %p262 = pneg %p162
      %p263 = pneg %p191
      %p264 = pneg %p188
      %s265 = smul.u32 13, %s18
      %p266 = scmp.lt.s32.totalorder %s265, 25
      %s267 = scalar_select %p266, %s265, 25
      %s268 = smul.addr %s267, 8
      %s269 = scalar_lea.vmem %s7, %s268
      %s270 = smul.u32 13, %s18
      %p271 = scmp.lt.s32.totalorder %s270, 25
      %s272 = scalar_select %p271, %s270, 25
      %s273 = smul.addr %s272, 8
      %s274 = scalar_lea.vmem %s0, %s273
      %s275 = smul.u32 13, %s18
      %s276 = smul.u32 13, %s18
      %p277 = scmp.lt.s32.totalorder %s276, 25
      %s278 = scalar_select %p277, %s276, 25
      %s279 = smul.addr %s278, 8
      %s280 = scalar_lea.vmem %s7, %s279
      %s281 = smul.u32 13, %s18
      %v283 = vld [vmem:[%s274] sm:$0xff]
      %v284 = vld [vmem:[%s274 + $0x8] sm:$0xff]
      %v285 = vld [vmem:[%s274 + $0x10] sm:$0xff]
      %v286 = vld [vmem:[%s274 + $0x18] sm:$0xff]
      %v287 = vld [vmem:[%s274 + $0x20] sm:$0xff]
      %v288 = vld [vmem:[%s274 + $0x28] sm:$0xff]
      %v289 = vld [vmem:[%s274 + $0x30] sm:$0xff]
      %v290 = vld [vmem:[%s274 + $0x38] sm:$0xff]
      %v291 = vld [vmem:[%s274 + $0x40] sm:$0xff]
      %v292 = vld [vmem:[%s274 + $0x48] sm:$0xff]
      %v293 = vld [vmem:[%s274 + $0x50] sm:$0xff]
      %v294 = vld [vmem:[%s274 + $0x58] sm:$0xff]
      %v295 = vld [vmem:[%s274 + $0x60] sm:$0xff]
      %v296 = vpack.c.bf16 %v284, %v283
      %v297 = vpack.c.bf16 %v286, %v285
      %v298 = vpack.c.bf16 %v288, %v287
      %v299 = vpack.c.bf16 %v290, %v289
      %v300 = vpack.c.bf16 %v292, %v291
      %v301 = vpack.c.bf16 %v294, %v293
      %v302 = vpack.c.bf16 %v295, %v295
      %v303 = vld [vmem:[%s1] sm:$0xf]
      %v304 = vld [vmem:[%s2] sm:$0x1]
      %v306 = vperm.slane %v304, 0
      %vm308 = vcmask 64512
      %v310 = vsel %vm308, %v296, 0
      %v313 = vsel %vm308, %v297, 0
      %v316 = vsel %vm308, %v298, 0
      %v319 = vsel %vm308, %v299, 0
      %v322 = vsel %vm308, %v300, 0
      %v325 = vsel %vm308, %v301, 0
      %v328 = vsel %vm308, %v302, 0
      %vm330 = vcmask 1043456
      %v332 = vsel %vm330, %v303, 0
      %334 = vmatpush.bf16.msra.mxu0 0
      %335 = vmatpush.bf16.msra.mxu0 0
      %336 = vmatpush.bf16.msra.mxu0 0
      %337 = vmatpush.bf16.msra.mxu0 0
      %338 = vmatpush.bf16.msra.mxu0 0
      %339 = vmatpush.bf16.msra.mxu0 0
      %340 = vmatpush.bf16.msra.mxu0 0
      %341 = vmatpush.bf16.msra.mxu0 %v332
      %342 = vmatmul.bf16.gmra.mxu0 %v310
      %v343 = vpop.f32.mrf.mxu0
      %v344 = vadd.f32 %v306, %v343
      %v345 = vpop.f32.mrf.mxu0
      %v346 = vadd.f32 %v306, %v345
      %347 = vmatmul.bf16.gmra.mxu0 %v313
      %v348 = vpop.f32.mrf.mxu0
      %v349 = vadd.f32 %v306, %v348
      %v350 = vpop.f32.mrf.mxu0
      %v351 = vadd.f32 %v306, %v350
      %352 = vmatmul.bf16.gmra.mxu0 %v316
      %v353 = vpop.f32.mrf.mxu0
      %v354 = vadd.f32 %v306, %v353
      %v355 = vpop.f32.mrf.mxu0
      %v356 = vadd.f32 %v306, %v355
      %357 = vmatmul.bf16.gmra.mxu0 %v319
      %v358 = vpop.f32.mrf.mxu0
      %v359 = vadd.f32 %v306, %v358
      %v360 = vpop.f32.mrf.mxu0
      %v361 = vadd.f32 %v306, %v360
      %362 = vmatmul.bf16.gmra.mxu0 %v322
      %v363 = vpop.f32.mrf.mxu0
      %v364 = vadd.f32 %v306, %v363
      %v365 = vpop.f32.mrf.mxu0
      %v366 = vadd.f32 %v306, %v365
      %367 = vmatmul.bf16.gmra.mxu0 %v325
      %v368 = vpop.f32.mrf.mxu0
      %v369 = vadd.f32 %v306, %v368
      %v370 = vpop.f32.mrf.mxu0
      %v371 = vadd.f32 %v306, %v370
      %372 = vmatmul.bf16.gmra.mxu0 %v328
      %v373 = vpop.f32.mrf.mxu0
      %v374 = vadd.f32 %v306, %v373
      %v375 = vpop.f32.mrf.mxu0
      %376 = vdwg.mxu0
      %v377 = vmax.f32 %v344, 0.0
      %v378 = vmax.f32 %v346, 0.0
      %v379 = vmax.f32 %v349, 0.0
      %v380 = vmax.f32 %v351, 0.0
      %v381 = vmax.f32 %v354, 0.0
      %v382 = vmax.f32 %v356, 0.0
      %v383 = vmax.f32 %v359, 0.0
      %v384 = vmax.f32 %v361, 0.0
      %v385 = vmax.f32 %v364, 0.0
      %v386 = vmax.f32 %v366, 0.0
      %v387 = vmax.f32 %v369, 0.0
      %v388 = vmax.f32 %v371, 0.0
      %v389 = vmax.f32 %v374, 0.0
      %v390 = vpack.c.bf16 %v378, %v377
      %v391 = vpack.c.bf16 %v380, %v379
      %v392 = vpack.c.bf16 %v382, %v381
      %v393 = vpack.c.bf16 %v384, %v383
      %v394 = vpack.c.bf16 %v386, %v385
      %v395 = vpack.c.bf16 %v388, %v387
      %v396 = vpack.c.bf16 %v389, %v389
      %v397 = vld [vmem:[%s3] sm:$0xf]
      %v398 = vld [vmem:[%s3 + $0x4] sm:$0xf]
      %v399 = vld [vmem:[%s3 + $0x8] sm:$0xf]
      %v400 = vld [vmem:[%s3 + $0xc] sm:$0xf]
      %v401 = vld [vmem:[%s3 + $0x10] sm:$0xf]
      %v402 = vld [vmem:[%s3 + $0x14] sm:$0xf]
      %v403 = vld [vmem:[%s3 + $0x18] sm:$0xf]
      %v404 = vld [vmem:[%s3 + $0x1c] sm:$0xf]
      %v405 = vld [vmem:[%s4] sm:$0x1]
      %v407 = vperm.slane %v405, 0
      %v417 = vunpack.c.l.b16 %v397
      %v418 = vunpack.c.l.b16 %v398
      %v419 = vunpack.c.l.b16 %v399
      %v420 = vunpack.c.l.b16 %v400
      %v421 = vunpack.c.l.b16 %v401
      %v422 = vunpack.c.l.b16 %v402
      %v423 = vunpack.c.l.b16 %v403
      %v424 = vunpack.c.l.b16 %v404
      %v425 = vpack.c.b16 %v418, %v417
      %v426 = vpack.c.b16 %v420, %v419
      %v427 = vpack.c.b16 %v422, %v421
      %v428 = vpack.c.b16 %v424, %v423
      %vm433 = vcmask 523264
      %v435 = vsel %vm433, %v390, 0
      %v438 = vsel %vm433, %v391, 0
      %v441 = vsel %vm433, %v392, 0
      %v444 = vsel %vm433, %v393, 0
      %v447 = vsel %vm433, %v394, 0
      %v450 = vsel %vm433, %v395, 0
      %v453 = vsel %vm433, %v396, 0
      %455 = vmatpush.bf16.msra.mxu0 0
      %456 = vmatpush.bf16.msra.mxu0 0
      %457 = vmatpush.bf16.msra.mxu0 0
      %458 = vmatpush.bf16.msra.mxu0 0
      %459 = vmatpush.bf16.msra.mxu0 %v428
      %460 = vmatpush.bf16.msra.mxu0 %v427
      %461 = vmatpush.bf16.msra.mxu0 %v426
      %462 = vmatpush.bf16.msra.mxu0 %v425
      %463 = vmatmul.bf16.gmra.mxu0 %v435
      %v464 = vpop.f32.mrf.mxu0
      %v465 = vadd.f32 %v407, %v464
      %v466 = vpop.f32.mrf.mxu0
      %v467 = vadd.f32 %v407, %v466
      %468 = vmatmul.bf16.gmra.mxu0 %v438
      %v469 = vpop.f32.mrf.mxu0
      %v470 = vadd.f32 %v407, %v469
      %v471 = vpop.f32.mrf.mxu0
      %v472 = vadd.f32 %v407, %v471
      %473 = vmatmul.bf16.gmra.mxu0 %v441
      %v474 = vpop.f32.mrf.mxu0
      %v475 = vadd.f32 %v407, %v474
      %v476 = vpop.f32.mrf.mxu0
      %v477 = vadd.f32 %v407, %v476
      %478 = vmatmul.bf16.gmra.mxu0 %v444
      %v479 = vpop.f32.mrf.mxu0
      %v480 = vadd.f32 %v407, %v479
      %v481 = vpop.f32.mrf.mxu0
      %v482 = vadd.f32 %v407, %v481
      %483 = vmatmul.bf16.gmra.mxu0 %v447
      %v484 = vpop.f32.mrf.mxu0
      %v485 = vadd.f32 %v407, %v484
      %v486 = vpop.f32.mrf.mxu0
      %v487 = vadd.f32 %v407, %v486
      %488 = vmatmul.bf16.gmra.mxu0 %v450
      %v489 = vpop.f32.mrf.mxu0
      %v490 = vadd.f32 %v407, %v489
      %v491 = vpop.f32.mrf.mxu0
      %v492 = vadd.f32 %v407, %v491
      %493 = vmatmul.bf16.gmra.mxu0 %v453
      %v494 = vpop.f32.mrf.mxu0
      %v495 = vadd.f32 %v407, %v494
      %v496 = vpop.f32.mrf.mxu0
      %497 = vdwg.mxu0
      %v498 = vmax.f32 %v465, 0.0
      %v499 = vmax.f32 %v467, 0.0
      %v500 = vmax.f32 %v470, 0.0
      %v501 = vmax.f32 %v472, 0.0
      %v502 = vmax.f32 %v475, 0.0
      %v503 = vmax.f32 %v477, 0.0
      %v504 = vmax.f32 %v480, 0.0
      %v505 = vmax.f32 %v482, 0.0
      %v506 = vmax.f32 %v485, 0.0
      %v507 = vmax.f32 %v487, 0.0
      %v508 = vmax.f32 %v490, 0.0
      %v509 = vmax.f32 %v492, 0.0
      %v510 = vmax.f32 %v495, 0.0
      %v511 = vpack.c.bf16 %v499, %v498
      %v512 = vpack.c.bf16 %v501, %v500
      %v513 = vpack.c.bf16 %v503, %v502
      %v514 = vpack.c.bf16 %v505, %v504
      %v515 = vpack.c.bf16 %v507, %v506
      %v516 = vpack.c.bf16 %v509, %v508
      %v517 = vpack.c.bf16 %v510, %v510
      %v518 = vld [vmem:[%s5] sm:$0xf]
      %v519 = vld [vmem:[%s5 + $0x4] sm:$0xf]
      %v520 = vld [vmem:[%s5 + $0x8] sm:$0xf]
      %v521 = vld [vmem:[%s5 + $0xc] sm:$0xf]
      %v522 = vld [vmem:[%s5 + $0x10] sm:$0xf]
      %v523 = vld [vmem:[%s5 + $0x14] sm:$0xf]
      %v524 = vld [vmem:[%s5 + $0x18] sm:$0xf]
      %v525 = vld [vmem:[%s5 + $0x1c] sm:$0xf]
      %v526 = vld [vmem:[%s6] sm:$0x1]
      %v528 = vperm.slane %v526, 0
      %v538 = vunpack.c.l.b16 %v518
      %v539 = vunpack.c.l.b16 %v519
      %v540 = vunpack.c.l.b16 %v520
      %v541 = vunpack.c.l.b16 %v521
      %v542 = vunpack.c.l.b16 %v522
      %v543 = vunpack.c.l.b16 %v523
      %v544 = vunpack.c.l.b16 %v524
      %v545 = vunpack.c.l.b16 %v525
      %v546 = vpack.c.b16 %v539, %v538
      %v547 = vpack.c.b16 %v541, %v540
      %v548 = vpack.c.b16 %v543, %v542
      %v549 = vpack.c.b16 %v545, %v544
      %v555 = vsel %vm433, %v511, 0
      %v558 = vsel %vm433, %v512, 0
      %v561 = vsel %vm433, %v513, 0
      %v564 = vsel %vm433, %v514, 0
      %v567 = vsel %vm433, %v515, 0
      %v570 = vsel %vm433, %v516, 0
      %v573 = vsel %vm433, %v517, 0
      %575 = vmatpush.bf16.msra.mxu0 0
      %576 = vmatpush.bf16.msra.mxu0 0
      %577 = vmatpush.bf16.msra.mxu0 0
      %578 = vmatpush.bf16.msra.mxu0 0
      %579 = vmatpush.bf16.msra.mxu0 %v549
      %580 = vmatpush.bf16.msra.mxu0 %v548
      %581 = vmatpush.bf16.msra.mxu0 %v547
      %582 = vmatpush.bf16.msra.mxu0 %v546
      %583 = vmatmul.bf16.gmra.mxu0 %v555
      %v584 = vpop.f32.mrf.mxu0
      %v585 = vadd.f32 %v528, %v584
      %v586 = vpop.f32.mrf.mxu0
      %v587 = vadd.f32 %v528, %v586
      %588 = vmatmul.bf16.gmra.mxu0 %v558
      %v589 = vpop.f32.mrf.mxu0
      %v590 = vadd.f32 %v528, %v589
      %v591 = vpop.f32.mrf.mxu0
      %v592 = vadd.f32 %v528, %v591
      %593 = vmatmul.bf16.gmra.mxu0 %v561
      %v594 = vpop.f32.mrf.mxu0
      %v595 = vadd.f32 %v528, %v594
      %v596 = vpop.f32.mrf.mxu0
      %v597 = vadd.f32 %v528, %v596
      %598 = vmatmul.bf16.gmra.mxu0 %v564
      %v599 = vpop.f32.mrf.mxu0
      %v600 = vadd.f32 %v528, %v599
      %v601 = vpop.f32.mrf.mxu0
      %v602 = vadd.f32 %v528, %v601
      %603 = vmatmul.bf16.gmra.mxu0 %v567
      %v604 = vpop.f32.mrf.mxu0
      %v605 = vadd.f32 %v528, %v604
      %v606 = vpop.f32.mrf.mxu0
      %v607 = vadd.f32 %v528, %v606
      %608 = vmatmul.bf16.gmra.mxu0 %v570
      %v609 = vpop.f32.mrf.mxu0
      %v610 = vadd.f32 %v528, %v609
      %v611 = vpop.f32.mrf.mxu0
      %v612 = vadd.f32 %v528, %v611
      %613 = vmatmul.bf16.gmra.mxu0 %v573
      %v614 = vpop.f32.mrf.mxu0
      %v615 = vadd.f32 %v528, %v614
      %v616 = vpop.f32.mrf.mxu0
      %617 = vdwg.mxu0
      %vm618 = vcmask 31744
      %619 = vst.msk [vmem:[%s280] sm:$0xff] %vm618, %v585
      %620 = vst.msk [vmem:[%s280 + $0x8] sm:$0xff] %vm618, %v587
      %621 = vst.msk [vmem:[%s280 + $0x10] sm:$0xff] %vm618, %v590
      %622 = vst.msk [vmem:[%s280 + $0x18] sm:$0xff] %vm618, %v592
      %623 = vst.msk [vmem:[%s280 + $0x20] sm:$0xff] %vm618, %v595
      %624 = vst.msk [vmem:[%s280 + $0x28] sm:$0xff] %vm618, %v597
      %625 = vst.msk [vmem:[%s280 + $0x30] sm:$0xff] %vm618, %v600
      %626 = vst.msk [vmem:[%s280 + $0x38] sm:$0xff] %vm618, %v602
      %627 = vst.msk [vmem:[%s280 + $0x40] sm:$0xff] %vm618, %v605
      %628 = vst.msk [vmem:[%s280 + $0x48] sm:$0xff] %vm618, %v607
      %629 = vst.msk [vmem:[%s280 + $0x50] sm:$0xff] %vm618, %v610
      %630 = vst.msk [vmem:[%s280 + $0x58] sm:$0xff] %vm618, %v612
      %631 = vst.msk [vmem:[%s280 + $0x60] sm:$0xff] %vm618, %v615
      %s632 = smul.u32 13, %s18
      %p633 = scmp.lt.s32.totalorder %s632, 25
      %s634 = scalar_select %p633, %s632, 25
      %s635 = smul.addr %s634, 8
      %s636 = scalar_lea.vmem %s7, %s635
      // Predicated region
      $region49: #{tpu_custom_call.1} parent=47 // pred_check
        %p637 = pneg %p188
      $region50: #{tpu_custom_call.1} parent=47 // pred_check_branch
        %639 = sbr.rel (%p637) target = $region52
      $region51: #{tpu_custom_call.1} parent=47 // pred_region
        %s640 = smul.u32 13, %s18
      $region52: #{tpu_custom_call.1} parent=47 // pred_fallthru
        _
    $region48: #{tpu_custom_call.1} parent=5 // pred_fallthru
      _
    %p641 = scmp.le.s32.totalorder 2, %s13
    // Predicated region
    $region53: #{tpu_custom_call.1} parent=5 // pred_check
      %p642 = pneg %p641
    $region54: #{tpu_custom_call.1} parent=5 // pred_check_branch
      %644 = sbr.rel (%p642) target = $region56
    $region55: #{tpu_custom_call.1} parent=5 // pred_region
      %s645 = ssub.s32 %s13, 2
      // Predicated region
      $region57: #{tpu_custom_call.1} parent=55 // pred_check
        %p646 = pneg %p194
      $region58: #{tpu_custom_call.1} parent=55 // pred_check_branch
        %648 = sbr.rel (%p646) target = $region60
      $region59: #{tpu_custom_call.1} parent=55 // pred_region
        %s649 = smul.u32 13, %s19
        %p650 = scmp.lt.s32.totalorder %s649, 25
        %s651 = scalar_select %p650, %s649, 25
        %s652 = smul.addr %s651, 8
        %s653 = scalar_lea.vmem %s7, %s652
      $region60: #{tpu_custom_call.1} parent=55 // pred_fallthru
        _
    $region56: #{tpu_custom_call.1} parent=5 // pred_fallthru
      _
  $region6: #{tpu_custom_call.1} parent=0 // loop_footer
    %s17 = sadd.s32 1, %s13
  $region7: #{tpu_custom_call.1} parent=0 // loop_footer_branch
    %12 = sbr.rel target = $region3
  $region8: #{tpu_custom_call.1} parent=0 // loop_exit
    _

</llo_original>
